<compile_context>
chip_gen: v6e
topology: v6e:2x2x1
jax: 0.10.0
libtpu: 0.0.40
codegen_flags: <defaults>
</compile_context>

<pallas_src>
import jax
import jax.numpy as jnp
from jax.experimental import pallas as pl
from jax.experimental.pallas import tpu as pltpu


def _cdiv(a, b):
    return -(-a // b)


def _round_up(x, m):
    return ((x + m - 1) // m) * m


def _vmem_capacity_bytes():
    """Physical VMEM per TensorCore: 128 MiB (v5e/v6e), 64 MiB (v7x)."""
    try:
        cap = int(pltpu.get_tpu_info().vmem_capacity_bytes)
        if cap > 0:
            return cap
    except Exception:
        pass
    try:
        kind = jax.devices()[0].device_kind.lower()
        if "v7" in kind:
            return 64 * 1024 * 1024
        if "v5" in kind or "v6" in kind:
            return 128 * 1024 * 1024
    except Exception:
        pass
    return 64 * 1024 * 1024  # conservative default


def _softmax_kernel_wide(x_ref, o_ref):
    """Un-packed path (f == 1): one softmax per row of the [tile, W] block."""
    x = x_ref[...].astype(jnp.float32)
    m = jnp.max(x, axis=-1, keepdims=True)
    e = jnp.exp(x - m)
    s = jnp.sum(e, axis=-1, keepdims=True)
    r = pl.reciprocal(s, approx=True)      # EUP slot (nearly free)
    r = r * (2.0 - s * r)                  # one Newton step -> ~f32 accuracy
    o_ref[...] = (e * r).astype(o_ref.dtype)


def _make_packed_kernel(f, W):
    """Packed path: f independent softmaxes of width W per [tile, f*W] row.

    Lane-dense structure: slices only for the f tiny max reduces; the max
    broadcast and the segment sums + broadcast go through the MXU (0/1
    matrices, precision=HIGHEST so accumulation stays ~f32-exact); sub/exp and
    the final normalize are single full-width passes.
    """

    def kernel(x_ref, bcast_ref, seg_ref, o_ref):
        x = x_ref[...].astype(jnp.float32)                       # [tile, f*W]
        # Per-segment maxes (the only non-lane-dense work; f <= 16, narrow).
        m = jnp.concatenate(
            [jnp.max(x[:, g * W:(g + 1) * W], axis=-1, keepdims=True)
             for g in range(f)],
            axis=-1,
        )                                                        # [tile, f]
        # Lane-broadcast the maxes via the (otherwise idle) MXU.
        m_b = jnp.dot(m, bcast_ref[...],
                      precision=jax.lax.Precision.HIGHEST,
                      preferred_element_type=jnp.float32)        # [tile, f*W]
        # Single full-width sub + exp pass (EUP work cut ~f-fold).
        e = jnp.exp(x - m_b)
        # Per-segment sums + lane broadcast in one block-diagonal MXU matmul.
        s_b = jnp.dot(e, seg_ref[...],
                      precision=jax.lax.Precision.HIGHEST,
                      preferred_element_type=jnp.float32)        # [tile, f*W]
        r = pl.reciprocal(s_b, approx=True)
        r = r * (2.0 - s_b * r)                                  # Newton step
        o_ref[...] = (e * r).astype(o_ref.dtype)

    return kernel


def softmax_last_dim(x):
    """Softmax over the last axis of x (== torch.softmax(x, dim=-1))."""
    orig_shape = x.shape
    W = int(orig_shape[-1])
    rows = 1
    for d in orig_shape[:-1]:
        rows *= int(d)
    if rows == 0 or W == 0:
        return x  # degenerate, nothing to compute

    itemsize = jnp.dtype(x.dtype).itemsize

    # ---- lane packing factor (must divide rows: no pad / slice HBM passes) --
    f = 1
    if W < 128:
        f_max = min(128 // W, 16)
        for cand in range(f_max, 0, -1):
            if rows % cand == 0:
                f = cand
                break
    # TODO(synk): rows with no divisor <= floor(128/W) fall back to f=1
    # (masked stores); still correct, just not lane-dense.
    Wp = f * W
    packed_rows = rows // f

    # ---- VMEM budget & row-tile selection (generation-aware) ---------------
    vmem_cap = _vmem_capacity_bytes()
    vmem_limit = min(vmem_cap * 3 // 4, 100 * 1024 * 1024)
    budget = max(vmem_limit - (8 << 20), vmem_limit // 2)
    # Per packed row: double-buffered in + out pipeline copies (input dtype)
    # plus ~6 live f32 full-width temporaries inside the kernel.
    bytes_per_row = Wp * (4 * itemsize + 6 * 4)
    sub = 8 * max(1, 4 // itemsize)            # sublane quantum (8 f32, 16 bf16)
    tile = budget // bytes_per_row
    tile = max(sub, min(int(tile), 16384))
    tile = (tile // sub) * sub

    if packed_rows <= sub:
        tile = packed_rows                     # block == full dim (allowed)
        grid_n = 1
    else:
        # Aim for >= 4 (else >= 2) programs so v7x's two TensorCores both get
        # a pipelined, balanced loop (no-op on v5e/v6e).
        target = 4 if packed_rows >= 4 * sub else 2
        tile = min(tile, _round_up(_cdiv(packed_rows, target), sub))
        tile = max(sub, (tile // sub) * sub)
        grid_n = _cdiv(packed_rows, tile)
        if grid_n > 1 and grid_n % 2 == 1:
            tile_try = max(sub, _round_up(_cdiv(packed_rows, grid_n + 1), sub))
            tile = tile_try
            grid_n = _cdiv(packed_rows, tile)
    # Note: if tile does not divide packed_rows, Pallas masks the ragged last
    # block (rows are independent, so the padded edge rows are harmless and
    # their writes are dropped). No jnp.pad / output slice needed.

    x2 = x.reshape(packed_rows, Wp)            # free metadata reshape

    cparams = pltpu.CompilerParams(
        dimension_semantics=("parallel",),
        vmem_limit_bytes=int(vmem_limit),
    )
    cost = pl.CostEstimate(
        flops=int(5 * rows * W + (2 * packed_rows * Wp * Wp if f > 1 else 0)),
        transcendentals=int(rows * W),
        bytes_accessed=int(2 * rows * W * itemsize),
    )

    if f == 1:
        out = pl.pallas_call(
            _softmax_kernel_wide,
            out_shape=jax.ShapeDtypeStruct((packed_rows, Wp), x.dtype),
            grid_spec=pltpu.PrefetchScalarGridSpec(
                num_scalar_prefetch=0,
                grid=(grid_n,),
                in_specs=[pl.BlockSpec((tile, Wp), lambda i: (i, 0))],
                out_specs=pl.BlockSpec((tile, Wp), lambda i: (i, 0)),
            ),
            compiler_params=cparams,
            cost_estimate=cost,
        )(x2)
    else:
        # Static 0/1 helper matrices for MXU-offloaded broadcast / segment sums.
        lane_seg = jnp.arange(Wp, dtype=jnp.int32) // W              # [Wp]
        bcast_mat = (lane_seg[None, :] ==
                     jnp.arange(f, dtype=jnp.int32)[:, None]
                     ).astype(jnp.float32)                           # [f, Wp]
        seg_mat = (lane_seg[None, :] == lane_seg[:, None]
                   ).astype(jnp.float32)                             # [Wp, Wp]

        out = pl.pallas_call(
            _make_packed_kernel(f, W),
            out_shape=jax.ShapeDtypeStruct((packed_rows, Wp), x.dtype),
            grid_spec=pltpu.PrefetchScalarGridSpec(
                num_scalar_prefetch=0,
                grid=(grid_n,),
                in_specs=[
                    pl.BlockSpec((tile, Wp), lambda i: (i, 0)),
                    pl.BlockSpec((f, Wp), lambda i: (0, 0)),
                    pl.BlockSpec((Wp, Wp), lambda i: (0, 0)),
                ],
                out_specs=pl.BlockSpec((tile, Wp), lambda i: (i, 0)),
            ),
            compiler_params=cparams,
            cost_estimate=cost,
        )(x2, bcast_mat, seg_mat)

    return out.reshape(orig_shape)


if __name__ == "__main__":
    key = jax.random.PRNGKey(0)
    # NCHW-like input, softmax over dim=-1 (W) as in the PyTorch module.
    x = jax.random.normal(key, (2, 4, 16, 16), dtype=jnp.float32)

    y = jax.block_until_ready(softmax_last_dim(x))

    # Reference check against jax.nn.softmax
    y_ref = jax.nn.softmax(x, axis=-1)
    assert y.shape == x.shape and y.dtype == x.dtype
    max_err = float(jnp.max(jnp.abs(y - y_ref)))
    assert jnp.allclose(y, y_ref, atol=1e-5, rtol=1e-5), max_err

    print("KERNEL_OK")
</pallas_src>

<mosaic_0001>
module attributes {stable_mosaic.version = 11 : i64} {
  func.func @kernel(%arg0: i32, %arg1: memref<8x128xf32, #tpu.memory_space<vmem>>, %arg2: memref<8x128xf32, #tpu.memory_space<vmem>>, %arg3: memref<128x128xf32, #tpu.memory_space<vmem>>, %arg4: memref<8x128xf32, #tpu.memory_space<vmem>>) attributes {dimension_semantics = [#tpu.dimension_semantics<parallel>], iteration_bounds = array<i64: 2>, scalar_prefetch = 0 : i64, scratch_operands = 0 : i64, tpu.core_type = #tpu.core_type<tc>, window_params = [{transform_indices = @transform_0, window_bounds = array<i64: 8, 128>}, {pipeline_mode = #tpu.pipeline_mode<synchronous>, transform_indices = @transform_1, window_bounds = array<i64: 8, 128>}, {pipeline_mode = #tpu.pipeline_mode<synchronous>, transform_indices = @transform_2, window_bounds = array<i64: 128, 128>}, {transform_indices = @transform_3, window_bounds = array<i64: 8, 128>}]} {
    %c0 = arith.constant 0 : index
    %c0_0 = arith.constant 0 : index
    %0 = vector.load %arg1[%c0, %c0_0] : memref<8x128xf32, #tpu.memory_space<vmem>>, vector<8x128xf32>
    %1 = vector.extract_strided_slice %0 {offsets = [0, 0], sizes = [8, 16], strides = [1, 1]} : vector<8x128xf32> to vector<8x16xf32>
    %cst = arith.constant dense<0xFF800000> : vector<8xf32>
    %2 = vector.multi_reduction <maximumf>, %1, %cst [1] : vector<8x16xf32> to vector<8xf32>
    %3 = vector.shape_cast %2 : vector<8xf32> to vector<8x1xf32>
    %4 = vector.extract_strided_slice %0 {offsets = [0, 16], sizes = [8, 16], strides = [1, 1]} : vector<8x128xf32> to vector<8x16xf32>
    %cst_1 = arith.constant dense<0xFF800000> : vector<8xf32>
    %5 = vector.multi_reduction <maximumf>, %4, %cst_1 [1] : vector<8x16xf32> to vector<8xf32>
    %6 = vector.shape_cast %5 : vector<8xf32> to vector<8x1xf32>
    %7 = vector.extract_strided_slice %0 {offsets = [0, 32], sizes = [8, 16], strides = [1, 1]} : vector<8x128xf32> to vector<8x16xf32>
    %cst_2 = arith.constant dense<0xFF800000> : vector<8xf32>
    %8 = vector.multi_reduction <maximumf>, %7, %cst_2 [1] : vector<8x16xf32> to vector<8xf32>
    %9 = vector.shape_cast %8 : vector<8xf32> to vector<8x1xf32>
    %10 = vector.extract_strided_slice %0 {offsets = [0, 48], sizes = [8, 16], strides = [1, 1]} : vector<8x128xf32> to vector<8x16xf32>
    %cst_3 = arith.constant dense<0xFF800000> : vector<8xf32>
    %11 = vector.multi_reduction <maximumf>, %10, %cst_3 [1] : vector<8x16xf32> to vector<8xf32>
    %12 = vector.shape_cast %11 : vector<8xf32> to vector<8x1xf32>
    %13 = vector.extract_strided_slice %0 {offsets = [0, 64], sizes = [8, 16], strides = [1, 1]} : vector<8x128xf32> to vector<8x16xf32>
    %cst_4 = arith.constant dense<0xFF800000> : vector<8xf32>
    %14 = vector.multi_reduction <maximumf>, %13, %cst_4 [1] : vector<8x16xf32> to vector<8xf32>
    %15 = vector.shape_cast %14 : vector<8xf32> to vector<8x1xf32>
    %16 = vector.extract_strided_slice %0 {offsets = [0, 80], sizes = [8, 16], strides = [1, 1]} : vector<8x128xf32> to vector<8x16xf32>
    %cst_5 = arith.constant dense<0xFF800000> : vector<8xf32>
    %17 = vector.multi_reduction <maximumf>, %16, %cst_5 [1] : vector<8x16xf32> to vector<8xf32>
    %18 = vector.shape_cast %17 : vector<8xf32> to vector<8x1xf32>
    %19 = vector.extract_strided_slice %0 {offsets = [0, 96], sizes = [8, 16], strides = [1, 1]} : vector<8x128xf32> to vector<8x16xf32>
    %cst_6 = arith.constant dense<0xFF800000> : vector<8xf32>
    %20 = vector.multi_reduction <maximumf>, %19, %cst_6 [1] : vector<8x16xf32> to vector<8xf32>
    %21 = vector.shape_cast %20 : vector<8xf32> to vector<8x1xf32>
    %22 = vector.extract_strided_slice %0 {offsets = [0, 112], sizes = [8, 16], strides = [1, 1]} : vector<8x128xf32> to vector<8x16xf32>
    %cst_7 = arith.constant dense<0xFF800000> : vector<8xf32>
    %23 = vector.multi_reduction <maximumf>, %22, %cst_7 [1] : vector<8x16xf32> to vector<8xf32>
    %24 = vector.shape_cast %23 : vector<8xf32> to vector<8x1xf32>
    %25 = tpu.concatenate %3, %6, %9, %12, %15, %18, %21, %24 in 1 : vector<8x1xf32>, vector<8x1xf32>, vector<8x1xf32>, vector<8x1xf32>, vector<8x1xf32>, vector<8x1xf32>, vector<8x1xf32>, vector<8x1xf32> -> vector<8x8xf32>
    %c0_8 = arith.constant 0 : index
    %c0_9 = arith.constant 0 : index
    %26 = vector.load %arg2[%c0_8, %c0_9] : memref<8x128xf32, #tpu.memory_space<vmem>>, vector<8x128xf32>
    %cst_10 = arith.constant dense<0.000000e+00> : vector<8x128xf32>
    %27 = tpu.matmul %25, %26, %cst_10 {dimension_numbers = #tpu.dot_dimension_numbers<[1], [0], [0], [1], [0, 0, 1, 1], [], []>, precision = #tpu.contract_precision<fp32>} : vector<8x8xf32>, vector<8x128xf32>, vector<8x128xf32> -> vector<8x128xf32>
    %28 = arith.subf %0, %27 : vector<8x128xf32>
    %29 = math.exp %28 : vector<8x128xf32>
    %c0_11 = arith.constant 0 : index
    %c0_12 = arith.constant 0 : index
    %30 = vector.load %arg3[%c0_11, %c0_12] : memref<128x128xf32, #tpu.memory_space<vmem>>, vector<128x128xf32>
    %cst_13 = arith.constant dense<0.000000e+00> : vector<8x128xf32>
    %31 = tpu.matmul %29, %30, %cst_13 {dimension_numbers = #tpu.dot_dimension_numbers<[1], [0], [0], [1], [0, 0, 1, 1], [], []>, precision = #tpu.contract_precision<fp32>} : vector<8x128xf32>, vector<128x128xf32>, vector<8x128xf32> -> vector<8x128xf32>
    %32 = tpu.reciprocal %31 {approx = true} : vector<8x128xf32> -> vector<8x128xf32>
    %33 = arith.mulf %31, %32 : vector<8x128xf32>
    %cst_14 = arith.constant 2.000000e+00 : f32
    %34 = vector.broadcast %cst_14 : f32 to vector<8x128xf32>
    %35 = arith.subf %34, %33 : vector<8x128xf32>
    %36 = arith.mulf %32, %35 : vector<8x128xf32>
    %37 = arith.mulf %29, %36 : vector<8x128xf32>
    %c0_15 = arith.constant 0 : index
    %c0_16 = arith.constant 0 : index
    %38 = vector.load %arg4[%c0_15, %c0_16] : memref<8x128xf32, #tpu.memory_space<vmem>>, vector<8x128xf32>
    tpu.vector_store %arg4[%c0_15, %c0_16], %37 {strides = array<i32>} : memref<8x128xf32, #tpu.memory_space<vmem>>, vector<8x128xf32>,
    return
  }
  func.func @transform_0(%arg0: i32) -> (i32, i32) {
    %c0_i32 = arith.constant 0 : i32
    %c0_i32_0 = arith.constant 0 : i32
    return %arg0, %c0_i32 : i32, i32
  }
  func.func @transform_1(%arg0: i32) -> (i32, i32) {
    %c0_i32 = arith.constant 0 : i32
    %c0_i32_0 = arith.constant 0 : i32
    %c0_i32_1 = arith.constant 0 : i32
    return %c0_i32, %c0_i32_0 : i32, i32
  }
  func.func @transform_2(%arg0: i32) -> (i32, i32) {
    %c0_i32 = arith.constant 0 : i32
    %c0_i32_0 = arith.constant 0 : i32
    %c0_i32_1 = arith.constant 0 : i32
    return %c0_i32, %c0_i32_0 : i32, i32
  }
  func.func @transform_3(%arg0: i32) -> (i32, i32) {
    %c0_i32 = arith.constant 0 : i32
    %c0_i32_0 = arith.constant 0 : i32
    return %arg0, %c0_i32 : i32, i32
  }
}

</mosaic_0001>

<llo_original>
// kernel: tpu_custom_call.1
$region0: #{tpu_custom_call.1}
  #allocation0 [shape = 'u32[]', space=smem, size = 0x4, offset = 0x4, fixed_abs, tag = 'smem constant byte address 0x4 - core index']
  #allocation1 [shape = 'u32[144,128]{1,0:T(1,128)}', space=vmem, size = 0x12000, scoped, tag = 'internal scratch']
  %s0 = inlined_call_operand.hbm [shape: f32[16,128], index: 0, kind: input, shape index: {}]
  %s1 = inlined_call_operand.hbm [shape: f32[8,128], index: 1, kind: input, shape index: {}]
  %s2 = inlined_call_operand.hbm [shape: f32[128,128], index: 2, kind: input, shape index: {}]
  %s3 = inlined_call_operand.hbm [shape: f32[16,128], index: 3, kind: output, shape index: {}]
  %s4 = sld [smem:[#allocation0]]
  $region57: #{tpu_custom_call.1} parent=0
    _
  %s6 = ssub.s32 1, %s4
  %s7 = scalar_select 0, %s6, %s4
  $region1: #{tpu_custom_call.1} parent=0
    #allocation2 [shape = 'u8[8192]{0}', space=vmem, size = 0x2000, scoped, tag = 'input window, operand 0']
    #allocation3 [shape = 's32[2]{0}', space=sflag, size = 0x8, scoped, tag = 'scoped memory for tpu_custom_call.1']
    #allocation4 [shape = 's32[2]{0}', space=sflag, size = 0x8, scoped, tag = 'scoped memory for tpu_custom_call.1']
    #allocation5 [shape = 'u8[4096]{0}', space=vmem, size = 0x1000, scoped, tag = 'input window, operand 1, single buffered']
    #allocation6 [shape = 's32[1]{0}', space=sflag, size = 0x4, scoped, tag = 'scoped memory for tpu_custom_call.1']
    #allocation7 [shape = 'u8[65536]{0}', space=vmem, size = 0x10000, scoped, tag = 'input window, operand 2, single buffered']
    #allocation8 [shape = 'u8[8192]{0}', space=vmem, size = 0x2000, scoped, tag = 'output window, operand 0']
    %8 = vsyncpa [#allocation3], 0
    %s9 = scalar_lea.sflag [#allocation3], 1
    %10 = vsyncpa %s9, 0
    %11 = vsyncpa [#allocation6], 0
    %12 = vsyncpa [#allocation4], 0
    %s13 = scalar_lea.sflag [#allocation4], 1
    %14 = vsyncpa %s13, 0
    loop: start=0, step=1, limit=4
    $region2: #{tpu_custom_call.1} parent=1 // loop_pre_header
      _
    $region3: #{tpu_custom_call.1} parent=1 // loop_header
      %s16 = sphi 0, %s20
      %p17 = scmp.ge.s32.totalorder %s16, 4
      %s26 = sphi 0, %s28
      %s29 = sphi 0, %s26
      %s30 = sphi 0, %s29
      %s46 = sphi 0, %s30
      %s50 = sphi 0, %s50
      %s52 = sphi 0, %s50
      %s53 = sphi 0, %s52
      %s67 = sphi 0, %s53
      %s71 = sphi 0, %s71
      %s73 = sphi 0, %s71
      %s74 = sphi 0, %s73
      %s88 = sphi 0, %s74
      %s94 = sphi 0, %s96
      %s97 = sphi 0, %s94
      %s98 = sphi 0, %s97
      %s114 = sphi 0, %s98
    $region4: #{tpu_custom_call.1} parent=1 // loop_header_branch
      %19 = sbr.rel (%p17) target = $region8
    $region5: #{tpu_custom_call.1} parent=1 // loop_body
      %s21 = ssub.s32 %s16, 1
      %s22 = ssub.s32 %s16, 2
      %s23 = sadd.s32 %s16, 1
      %s24 = ssub.s32 %s16, %s23
      %p25 = scmp.eq.s32.totalorder %s24, 0
      %s27 = sadd.s32 %s26, 1
      %s28 = scalar_select %p25, %s26, %s27
      %p31 = pneg %p25
      %p32 = scmp.eq.s32.totalorder %s16, 1
      %p33 = por %p31, %p32
      %p34 = scmp.ne.s32.totalorder %s26, %s29
      %p35 = scmp.eq.s32.totalorder %s16, 0
      %p36 = por %p34, %p35
      %p37 = scmp.ne.s32.totalorder %s26, %s29
      %p38 = scmp.eq.s32.totalorder %s21, 1
      %p39 = por %p37, %p38
      %p40 = scmp.ne.s32.totalorder %s29, %s30
      %p41 = scmp.eq.s32.totalorder %s21, 0
      %p42 = por %p40, %p41
      %p43 = scmp.ne.s32.totalorder %s29, %s30
      %p44 = scmp.eq.s32.totalorder %s22, 1
      %p45 = por %p43, %p44
      %p47 = scmp.ne.s32.totalorder %s30, %s46
      %p48 = scmp.eq.s32.totalorder %s22, 0
      %p49 = por %p47, %p48
      %s51 = sadd.s32 %s50, 1
      %p54 = scmp.eq.s32.totalorder %s16, 1
      %p55 = scmp.ne.s32.totalorder %s50, %s52
      %p56 = scmp.eq.s32.totalorder %s16, 0
      %p57 = por %p55, %p56
      %p58 = scmp.ne.s32.totalorder %s50, %s52
      %p59 = scmp.eq.s32.totalorder %s21, 1
      %p60 = por %p58, %p59
      %p61 = scmp.ne.s32.totalorder %s52, %s53
      %p62 = scmp.eq.s32.totalorder %s21, 0
      %p63 = por %p61, %p62
      %p64 = scmp.ne.s32.totalorder %s52, %s53
      %p65 = scmp.eq.s32.totalorder %s22, 1
      %p66 = por %p64, %p65
      %p68 = scmp.ne.s32.totalorder %s53, %s67
      %p69 = scmp.eq.s32.totalorder %s22, 0
      %p70 = por %p68, %p69
      %s72 = sadd.s32 %s71, 1
      %p75 = scmp.eq.s32.totalorder %s16, 1
      %p76 = scmp.ne.s32.totalorder %s71, %s73
      %p77 = scmp.eq.s32.totalorder %s16, 0
      %p78 = por %p76, %p77
      %p79 = scmp.ne.s32.totalorder %s71, %s73
      %p80 = scmp.eq.s32.totalorder %s21, 1
      %p81 = por %p79, %p80
      %p82 = scmp.ne.s32.totalorder %s73, %s74
      %p83 = scmp.eq.s32.totalorder %s21, 0
      %p84 = por %p82, %p83
      %p85 = scmp.ne.s32.totalorder %s73, %s74
      %p86 = scmp.eq.s32.totalorder %s22, 1
      %p87 = por %p85, %p86
      %p89 = scmp.ne.s32.totalorder %s74, %s88
      %p90 = scmp.eq.s32.totalorder %s22, 0
      %p91 = por %p89, %p90
      %s92 = ssub.s32 %s16, %s23
      %p93 = scmp.eq.s32.totalorder %s92, 0
      %s95 = sadd.s32 %s94, 1
      %s96 = scalar_select %p93, %s94, %s95
      %p99 = pneg %p93
      %p100 = scmp.eq.s32.totalorder %s16, 1
      %p101 = por %p99, %p100
      %p102 = scmp.ne.s32.totalorder %s94, %s97
      %p103 = scmp.eq.s32.totalorder %s16, 0
      %p104 = por %p102, %p103
      %p105 = scmp.ne.s32.totalorder %s94, %s97
      %p106 = scmp.eq.s32.totalorder %s21, 1
      %p107 = por %p105, %p106
      %p108 = scmp.ne.s32.totalorder %s97, %s98
      %p109 = scmp.eq.s32.totalorder %s21, 0
      %p110 = por %p108, %p109
      %p111 = scmp.ne.s32.totalorder %s97, %s98
      %p112 = scmp.eq.s32.totalorder %s22, 1
      %p113 = por %p111, %p112
      %p115 = scmp.ne.s32.totalorder %s98, %s114
      %p116 = scmp.eq.s32.totalorder %s22, 0
      %p117 = por %p115, %p116
      %p118 = scmp.le.s32.totalorder 1, %s16
      %p119 = scmp.lt.s32.totalorder %s16, 3
      %p120 = pnand %p118, %p119
      %p121 = pneg %p120
      // Predicated region
      $region9: #{tpu_custom_call.1} parent=5 // pred_check
        _
      $region10: #{tpu_custom_call.1} parent=5 // pred_check_branch
        %123 = sbr.rel (%p120) target = $region12
      $region11: #{tpu_custom_call.1} parent=5 // pred_region
        %s124 = ssub.s32 %s16, 1
        // Predicated region
        $region13: #{tpu_custom_call.1} parent=11 // pred_check
          %p125 = pneg %p63
        $region14: #{tpu_custom_call.1} parent=11 // pred_check_branch
          %127 = sbr.rel (%p125) target = $region16
        $region15: #{tpu_custom_call.1} parent=11 // pred_region
          %s129 = ssub.s32 128, 128
          %130 = vsyncadd [#allocation6], %s129
          %s132 = sshll.u32 [#allocation5], 4
          %s133 = int_to_ptr.vmem [resolvable:$true] %s132
          %135 = dma.hbm_to_vmem [thread:$0]  %s1, 128, %s133, [#allocation6]
        $region16: #{tpu_custom_call.1} parent=11 // pred_fallthru
          _
        // Predicated region
        $region17: #{tpu_custom_call.1} parent=11 // pred_check
          %p136 = pneg %p84
        $region18: #{tpu_custom_call.1} parent=11 // pred_check_branch
          %138 = sbr.rel (%p136) target = $region20
        $region19: #{tpu_custom_call.1} parent=11 // pred_region
          %s140 = ssub.s32 2048, 2048
          %141 = vsyncadd [#allocation6], %s140
          %s142 = sshll.u32 [#allocation7], 4
          %s143 = int_to_ptr.vmem [resolvable:$true] %s142
          %148 = dma.hbm_to_vmem [thread:$0]  %s2, 2048, %s143, [#allocation6], 128, 128, 8
        $region20: #{tpu_custom_call.1} parent=11 // pred_fallthru
          _
      $region12: #{tpu_custom_call.1} parent=5 // pred_fallthru
        _
      %p149 = scmp.lt.s32.totalorder %s16, 2
      // Predicated region
      $region21: #{tpu_custom_call.1} parent=5 // pred_check
        %p150 = pneg %p149
      $region22: #{tpu_custom_call.1} parent=5 // pred_check_branch
        %152 = sbr.rel (%p150) target = $region24
      $region23: #{tpu_custom_call.1} parent=5 // pred_region
        // Predicated region
        $region25: #{tpu_custom_call.1} parent=23 // pred_check
          %p153 = pneg %p36
        $region26: #{tpu_custom_call.1} parent=23 // pred_check_branch
          %155 = sbr.rel (%p153) target = $region28
        $region27: #{tpu_custom_call.1} parent=23 // pred_region
          %s156 = sand.u32 %s26, 1
          %s157 = scalar_lea.sflag [#allocation3], %s156
          %s158 = sand.u32 %s26, 1
          %s159 = smul.addr %s158, 8
          %s160 = scalar_lea.vmem [#allocation2], %s159
          %s162 = ssub.s32 128, 128
          %163 = vsyncadd %s157, %s162
          %s164 = smul.addr %s16, 128
          %s165 = scalar_lea.hbm %s0, %s164
          %s167 = sshll.u32 %s160, 4
          %s168 = int_to_ptr.vmem [resolvable:$true] %s167
          %170 = dma.hbm_to_vmem [thread:$0]  %s165, 128, %s168, %s157
        $region28: #{tpu_custom_call.1} parent=23 // pred_fallthru
          _
      $region24: #{tpu_custom_call.1} parent=5 // pred_fallthru
        _
      %p171 = scmp.le.s32.totalorder 1, %s16
      %p172 = scmp.lt.s32.totalorder %s16, 3
      %p173 = pnand %p171, %p172
      %p174 = pneg %p173
      // Predicated region
      $region29: #{tpu_custom_call.1} parent=5 // pred_check
        _
      $region30: #{tpu_custom_call.1} parent=5 // pred_check_branch
        %176 = sbr.rel (%p173) target = $region32
      $region31: #{tpu_custom_call.1} parent=5 // pred_region
        %s177 = ssub.s32 %s16, 1
        %s178 = sand.u32 %s29, 1
        %s179 = scalar_lea.sflag [#allocation3], %s178
        %s180 = sand.u32 %s29, 1
        %s181 = smul.addr %s180, 8
        %s182 = scalar_lea.vmem [#allocation2], %s181
        // Predicated region
        $region33: #{tpu_custom_call.1} parent=31 // pred_check
          %p183 = pneg %p42
        $region34: #{tpu_custom_call.1} parent=31 // pred_check_branch
          %185 = sbr.rel (%p183) target = $region36
        $region35: #{tpu_custom_call.1} parent=31 // pred_region
          %186 = dma.done %s179, 128
        $region36: #{tpu_custom_call.1} parent=31 // pred_fallthru
          _
        // Predicated region
        $region37: #{tpu_custom_call.1} parent=31 // pred_check
          %p187 = pneg %p63
        $region38: #{tpu_custom_call.1} parent=31 // pred_check_branch
          %189 = sbr.rel (%p187) target = $region40
        $region39: #{tpu_custom_call.1} parent=31 // pred_region
          %190 = dma.done [#allocation6], 128
        $region40: #{tpu_custom_call.1} parent=31 // pred_fallthru
          _
        // Predicated region
        $region41: #{tpu_custom_call.1} parent=31 // pred_check
          %p191 = pneg %p84
        $region42: #{tpu_custom_call.1} parent=31 // pred_check_branch
          %193 = sbr.rel (%p191) target = $region44
        $region43: #{tpu_custom_call.1} parent=31 // pred_region
          %194 = dma.done [#allocation6], 2048
        $region44: #{tpu_custom_call.1} parent=31 // pred_fallthru
          _
        %s195 = sand.u32 %s29, 1
        %s196 = scalar_lea.sflag [#allocation3], %s195
        %s197 = sand.u32 %s29, 1
        %s198 = smul.addr %s197, 8
        %s199 = scalar_lea.vmem [#allocation2], %s198
        %p200 = pneg %p42
        %p201 = pneg %p39
        %p202 = pneg %p63
        %p203 = pneg %p60
        %p204 = pneg %p84
        %p205 = pneg %p81
        %p206 = pneg %p110
        %p207 = pneg %p107
        %s208 = sand.u32 %s97, 1
        %s209 = scalar_lea.sflag [#allocation4], %s208
        %s210 = sand.u32 %s97, 1
        %s211 = smul.addr %s210, 8
        %s212 = scalar_lea.vmem [#allocation8], %s211
        %v213 = vld [vmem:[%s182] sm:$0xff]
        %vm214 = vcmask 130048
        %v215 = vsel %vm214, %v213, -inf
        %216 = vmax.xlane.f32.xlu0 %v215
        %v217 = vpop.xlane.xlu0 %216
        %vm218 = vcmask 261248
        %v219 = vsel %vm218, %v213, -inf
        %220 = vmax.xlane.f32.xlu0 %v219
        %v221 = vpop.xlane.xlu0 %220
        %vm222 = vcmask 392448
        %v223 = vsel %vm222, %v213, -inf
        %224 = vmax.xlane.f32.xlu0 %v223
        %v225 = vpop.xlane.xlu0 %224
        %vm226 = vcmask 523648
        %v227 = vsel %vm226, %v213, -inf
        %228 = vmax.xlane.f32.xlu0 %v227
        %v229 = vpop.xlane.xlu0 %228
        %vm230 = vcmask 654848
        %v231 = vsel %vm230, %v213, -inf
        %232 = vmax.xlane.f32.xlu0 %v231
        %v233 = vpop.xlane.xlu0 %232
        %vm234 = vcmask 786048
        %v235 = vsel %vm234, %v213, -inf
        %236 = vmax.xlane.f32.xlu0 %v235
        %v237 = vpop.xlane.xlu0 %236
        %vm238 = vcmask 917248
        %v239 = vsel %vm238, %v213, -inf
        %240 = vmax.xlane.f32.xlu0 %v239
        %v241 = vpop.xlane.xlu0 %240
        %vm242 = vcmask 1048448
        %v243 = vsel %vm242, %v213, -inf
        %244 = vmax.xlane.f32.xlu0 %v243
        %v245 = vpop.xlane.xlu0 %244
        %vm246 = vcmask 7168
        %v247 = vsel %vm246, %v217, %v221
        %vm248 = vcmask 15360
        %v249 = vsel %vm248, %v247, %v225
        %vm250 = vcmask 23552
        %v251 = vsel %vm250, %v249, %v229
        %vm252 = vcmask 31744
        %v253 = vsel %vm252, %v251, %v233
        %vm254 = vcmask 39936
        %v255 = vsel %vm254, %v253, %v237
        %vm256 = vcmask 48128
        %v257 = vsel %vm256, %v255, %v241
        %vm258 = vcmask 56320
        %v259 = vsel %vm258, %v257, %v245
        %v260 = vld [vmem:[#allocation5] sm:$0xff]
        %vm261 = vcmask 64512
        %v263 = vsel %vm261, %v259, 0
        %265 = vmatprep.subr.mxu0 0.0
        %266 = vmatpush1.msra.mxu0 0.0
        %267 = vmatprep.subr.mxu0 0.0
        %268 = vmatpush1.msra.mxu0 0.0
        %269 = vmatprep.subr.mxu0 0.0
        %270 = vmatpush1.msra.mxu0 0.0
        %271 = vmatprep.subr.mxu0 0.0
        %272 = vmatpush1.msra.mxu0 0.0
        %273 = vmatprep.subr.mxu0 0.0
        %274 = vmatpush1.msra.mxu0 0.0
        %275 = vmatprep.subr.mxu0 0.0
        %276 = vmatpush1.msra.mxu0 0.0
        %277 = vmatprep.subr.mxu0 0.0
        %278 = vmatpush1.msra.mxu0 0.0
        %279 = vmatprep.subr.mxu0 0.0
        %280 = vmatpush1.msra.mxu0 0.0
        %281 = vmatprep.subr.mxu0 0.0
        %282 = vmatpush1.msra.mxu0 0.0
        %283 = vmatprep.subr.mxu0 0.0
        %284 = vmatpush1.msra.mxu0 0.0
        %285 = vmatprep.subr.mxu0 0.0
        %286 = vmatpush1.msra.mxu0 0.0
        %287 = vmatprep.subr.mxu0 0.0
        %288 = vmatpush1.msra.mxu0 0.0
        %289 = vmatprep.subr.mxu0 0.0
        %290 = vmatpush1.msra.mxu0 0.0
        %291 = vmatprep.subr.mxu0 0.0
        %292 = vmatpush1.msra.mxu0 0.0
        %293 = vmatprep.subr.mxu0 0.0
        %294 = vmatpush1.msra.mxu0 0.0
        %295 = vmatprep.subr.mxu0 0.0
        %v296 = vand.u32 %v260, 4294901760
        %297 = vmatpush1.msra.mxu0 %v296
        %298 = vmatprep.subr.mxu0 0.0
        %299 = vmatpush2.msra.mxu0 0.0
        %300 = vmatprep.subr.mxu0 0.0
        %301 = vmatpush2.msra.mxu0 0.0
        %302 = vmatprep.subr.mxu0 0.0
        %303 = vmatpush2.msra.mxu0 0.0
        %304 = vmatprep.subr.mxu0 0.0
        %305 = vmatpush2.msra.mxu0 0.0
        %306 = vmatprep.subr.mxu0 0.0
        %307 = vmatpush2.msra.mxu0 0.0
        %308 = vmatprep.subr.mxu0 0.0
        %309 = vmatpush2.msra.mxu0 0.0
        %310 = vmatprep.subr.mxu0 0.0
        %311 = vmatpush2.msra.mxu0 0.0
        %312 = vmatprep.subr.mxu0 0.0
        %313 = vmatpush2.msra.mxu0 0.0
        %314 = vmatprep.subr.mxu0 0.0
        %315 = vmatpush2.msra.mxu0 0.0
        %316 = vmatprep.subr.mxu0 0.0
        %317 = vmatpush2.msra.mxu0 0.0
        %318 = vmatprep.subr.mxu0 0.0
        %319 = vmatpush2.msra.mxu0 0.0
        %320 = vmatprep.subr.mxu0 0.0
        %321 = vmatpush2.msra.mxu0 0.0
        %322 = vmatprep.subr.mxu0 0.0
        %323 = vmatpush2.msra.mxu0 0.0
        %324 = vmatprep.subr.mxu0 0.0
        %325 = vmatpush2.msra.mxu0 0.0
        %326 = vmatprep.subr.mxu0 0.0
        %327 = vmatpush2.msra.mxu0 0.0
        %328 = vmatprep.subr.mxu0 0.0
        %329 = vmatpush2.msra.mxu0 0.0
        %330 = vmatprep.mubr.f32.mxu0 0.0
        %v331 = vand.u32 %v263, 4294901760
        %v332 = vsub.f32 %v263, %v331
        %v333 = vand.u32 %v332, 4294901760
        %v334 = vsub.f32 %v332, %v333
        %v335 = vand.u32 %v334, 4294901760
        %336 = vmatmul.mubr.f32.gmra.mxu0 %v335
        %v337 = vpop.f32.mrf.mxu0
        %v338 = vadd.f32 0.0, %v337
        %v339 = vpop.f32.mrf.mxu0
        %340 = vdwg.mxu0
        %341 = vmatprep.subr.mxu0 0.0
        %342 = vmatpush1.msra.mxu0 0.0
        %343 = vmatprep.subr.mxu0 0.0
        %344 = vmatpush1.msra.mxu0 0.0
        %345 = vmatprep.subr.mxu0 0.0
        %346 = vmatpush1.msra.mxu0 0.0
        %347 = vmatprep.subr.mxu0 0.0
        %348 = vmatpush1.msra.mxu0 0.0
        %349 = vmatprep.subr.mxu0 0.0
        %350 = vmatpush1.msra.mxu0 0.0
        %351 = vmatprep.subr.mxu0 0.0
        %352 = vmatpush1.msra.mxu0 0.0
        %353 = vmatprep.subr.mxu0 0.0
        %354 = vmatpush1.msra.mxu0 0.0
        %355 = vmatprep.subr.mxu0 0.0
        %356 = vmatpush1.msra.mxu0 0.0
        %357 = vmatprep.subr.mxu0 0.0
        %358 = vmatpush1.msra.mxu0 0.0
        %359 = vmatprep.subr.mxu0 0.0
        %360 = vmatpush1.msra.mxu0 0.0
        %361 = vmatprep.subr.mxu0 0.0
        %362 = vmatpush1.msra.mxu0 0.0
        %363 = vmatprep.subr.mxu0 0.0
        %364 = vmatpush1.msra.mxu0 0.0
        %365 = vmatprep.subr.mxu0 0.0
        %366 = vmatpush1.msra.mxu0 0.0
        %367 = vmatprep.subr.mxu0 0.0
        %368 = vmatpush1.msra.mxu0 0.0
        %369 = vmatprep.subr.mxu0 0.0
        %370 = vmatpush1.msra.mxu0 0.0
        %371 = vmatprep.subr.mxu0 0.0
        %v372 = vand.u32 %v260, 4294901760
        %v373 = vsub.f32 %v260, %v372
        %v374 = vand.u32 %v373, 4294901760
        %v375 = vsub.f32 %v373, %v374
        %v376 = vand.u32 %v375, 4294901760
        %377 = vmatpush1.msra.mxu0 %v376
        %378 = vmatprep.subr.mxu0 0.0
        %379 = vmatpush2.msra.mxu0 0.0
        %380 = vmatprep.subr.mxu0 0.0
        %381 = vmatpush2.msra.mxu0 0.0
        %382 = vmatprep.subr.mxu0 0.0
        %383 = vmatpush2.msra.mxu0 0.0
        %384 = vmatprep.subr.mxu0 0.0
        %385 = vmatpush2.msra.mxu0 0.0
        %386 = vmatprep.subr.mxu0 0.0
        %387 = vmatpush2.msra.mxu0 0.0
        %388 = vmatprep.subr.mxu0 0.0
        %389 = vmatpush2.msra.mxu0 0.0
        %390 = vmatprep.subr.mxu0 0.0
        %391 = vmatpush2.msra.mxu0 0.0
        %392 = vmatprep.subr.mxu0 0.0
        %393 = vmatpush2.msra.mxu0 0.0
        %394 = vmatprep.subr.mxu0 0.0
        %395 = vmatpush2.msra.mxu0 0.0
        %396 = vmatprep.subr.mxu0 0.0
        %397 = vmatpush2.msra.mxu0 0.0
        %398 = vmatprep.subr.mxu0 0.0
        %399 = vmatpush2.msra.mxu0 0.0
        %400 = vmatprep.subr.mxu0 0.0
        %401 = vmatpush2.msra.mxu0 0.0
        %402 = vmatprep.subr.mxu0 0.0
        %403 = vmatpush2.msra.mxu0 0.0
        %404 = vmatprep.subr.mxu0 0.0
        %405 = vmatpush2.msra.mxu0 0.0
        %406 = vmatprep.subr.mxu0 0.0
        %407 = vmatpush2.msra.mxu0 0.0
        %408 = vmatprep.subr.mxu0 0.0
        %409 = vmatpush2.msra.mxu0 0.0
        %410 = vmatprep.mubr.f32.mxu0 0.0
        %v411 = vand.u32 %v263, 4294901760
        %412 = vmatmul.mubr.f32.gmra.mxu0 %v411
        %v413 = vpop.f32.mrf.mxu0
        %v414 = vadd.f32 %v338, %v413
        %v415 = vpop.f32.mrf.mxu0
        %416 = vdwg.mxu0
        %417 = vmatprep.subr.mxu0 0.0
        %418 = vmatpush1.msra.mxu0 0.0
        %419 = vmatprep.subr.mxu0 0.0
        %420 = vmatpush1.msra.mxu0 0.0
        %421 = vmatprep.subr.mxu0 0.0
        %422 = vmatpush1.msra.mxu0 0.0
        %423 = vmatprep.subr.mxu0 0.0
        %424 = vmatpush1.msra.mxu0 0.0
        %425 = vmatprep.subr.mxu0 0.0
        %426 = vmatpush1.msra.mxu0 0.0
        %427 = vmatprep.subr.mxu0 0.0
        %428 = vmatpush1.msra.mxu0 0.0
        %429 = vmatprep.subr.mxu0 0.0
        %430 = vmatpush1.msra.mxu0 0.0
        %431 = vmatprep.subr.mxu0 0.0
        %432 = vmatpush1.msra.mxu0 0.0
        %433 = vmatprep.subr.mxu0 0.0
        %434 = vmatpush1.msra.mxu0 0.0
        %435 = vmatprep.subr.mxu0 0.0
        %436 = vmatpush1.msra.mxu0 0.0
        %437 = vmatprep.subr.mxu0 0.0
        %438 = vmatpush1.msra.mxu0 0.0
        %439 = vmatprep.subr.mxu0 0.0
        %440 = vmatpush1.msra.mxu0 0.0
        %441 = vmatprep.subr.mxu0 0.0
        %442 = vmatpush1.msra.mxu0 0.0
        %443 = vmatprep.subr.mxu0 0.0
        %444 = vmatpush1.msra.mxu0 0.0
        %445 = vmatprep.subr.mxu0 0.0
        %446 = vmatpush1.msra.mxu0 0.0
        %447 = vmatprep.subr.mxu0 0.0
        %v448 = vand.u32 %v260, 4294901760
        %v449 = vsub.f32 %v260, %v448
        %450 = vmatpush1.msra.mxu0 %v449
        %451 = vmatprep.subr.mxu0 0.0
        %452 = vmatpush2.msra.mxu0 0.0
        %453 = vmatprep.subr.mxu0 0.0
        %454 = vmatpush2.msra.mxu0 0.0
        %455 = vmatprep.subr.mxu0 0.0
        %456 = vmatpush2.msra.mxu0 0.0
        %457 = vmatprep.subr.mxu0 0.0
        %458 = vmatpush2.msra.mxu0 0.0
        %459 = vmatprep.subr.mxu0 0.0
        %460 = vmatpush2.msra.mxu0 0.0
        %461 = vmatprep.subr.mxu0 0.0
        %462 = vmatpush2.msra.mxu0 0.0
        %463 = vmatprep.subr.mxu0 0.0
        %464 = vmatpush2.msra.mxu0 0.0
        %465 = vmatprep.subr.mxu0 0.0
        %466 = vmatpush2.msra.mxu0 0.0
        %467 = vmatprep.subr.mxu0 0.0
        %468 = vmatpush2.msra.mxu0 0.0
        %469 = vmatprep.subr.mxu0 0.0
        %470 = vmatpush2.msra.mxu0 0.0
        %471 = vmatprep.subr.mxu0 0.0
        %472 = vmatpush2.msra.mxu0 0.0
        %473 = vmatprep.subr.mxu0 0.0
        %474 = vmatpush2.msra.mxu0 0.0
        %475 = vmatprep.subr.mxu0 0.0
        %476 = vmatpush2.msra.mxu0 0.0
        %477 = vmatprep.subr.mxu0 0.0
        %478 = vmatpush2.msra.mxu0 0.0
        %479 = vmatprep.subr.mxu0 0.0
        %480 = vmatpush2.msra.mxu0 0.0
        %481 = vmatprep.subr.mxu0 0.0
        %482 = vmatpush2.msra.mxu0 0.0
        %483 = vmatprep.mubr.f32.mxu0 0.0
        %v484 = vand.u32 %v263, 4294901760
        %v485 = vsub.f32 %v263, %v484
        %486 = vmatmul.mubr.f32.gmra.mxu0 %v485
        %v487 = vpop.f32.mrf.mxu0
        %v488 = vadd.f32 %v414, %v487
        %v489 = vpop.f32.mrf.mxu0
        %490 = vdwg.mxu0
        %491 = vmatprep.subr.mxu0 0.0
        %492 = vmatpush1.msra.mxu0 0.0
        %493 = vmatprep.subr.mxu0 0.0
        %494 = vmatpush1.msra.mxu0 0.0
        %495 = vmatprep.subr.mxu0 0.0
        %496 = vmatpush1.msra.mxu0 0.0
        %497 = vmatprep.subr.mxu0 0.0
        %498 = vmatpush1.msra.mxu0 0.0
        %499 = vmatprep.subr.mxu0 0.0
        %500 = vmatpush1.msra.mxu0 0.0
        %501 = vmatprep.subr.mxu0 0.0
        %502 = vmatpush1.msra.mxu0 0.0
        %503 = vmatprep.subr.mxu0 0.0
        %504 = vmatpush1.msra.mxu0 0.0
        %505 = vmatprep.subr.mxu0 0.0
        %506 = vmatpush1.msra.mxu0 0.0
        %507 = vmatprep.subr.mxu0 0.0
        %508 = vmatpush1.msra.mxu0 0.0
        %509 = vmatprep.subr.mxu0 0.0
        %510 = vmatpush1.msra.mxu0 0.0
        %511 = vmatprep.subr.mxu0 0.0
        %512 = vmatpush1.msra.mxu0 0.0
        %513 = vmatprep.subr.mxu0 0.0
        %514 = vmatpush1.msra.mxu0 0.0
        %515 = vmatprep.subr.mxu0 0.0
        %516 = vmatpush1.msra.mxu0 0.0
        %517 = vmatprep.subr.mxu0 0.0
        %518 = vmatpush1.msra.mxu0 0.0
        %519 = vmatprep.subr.mxu0 0.0
        %520 = vmatpush1.msra.mxu0 0.0
        %521 = vmatprep.subr.mxu0 0.0
        %v522 = vand.u32 %v260, 4294901760
        %523 = vmatpush1.msra.mxu0 %v522
        %524 = vmatprep.subr.mxu0 0.0
        %525 = vmatpush2.msra.mxu0 0.0
        %526 = vmatprep.subr.mxu0 0.0
        %527 = vmatpush2.msra.mxu0 0.0
        %528 = vmatprep.subr.mxu0 0.0
        %529 = vmatpush2.msra.mxu0 0.0
        %530 = vmatprep.subr.mxu0 0.0
        %531 = vmatpush2.msra.mxu0 0.0
        %532 = vmatprep.subr.mxu0 0.0
        %533 = vmatpush2.msra.mxu0 0.0
        %534 = vmatprep.subr.mxu0 0.0
        %535 = vmatpush2.msra.mxu0 0.0
        %536 = vmatprep.subr.mxu0 0.0
        %537 = vmatpush2.msra.mxu0 0.0
        %538 = vmatprep.subr.mxu0 0.0
        %539 = vmatpush2.msra.mxu0 0.0
        %540 = vmatprep.subr.mxu0 0.0
        %541 = vmatpush2.msra.mxu0 0.0
        %542 = vmatprep.subr.mxu0 0.0
        %543 = vmatpush2.msra.mxu0 0.0
        %544 = vmatprep.subr.mxu0 0.0
        %545 = vmatpush2.msra.mxu0 0.0
        %546 = vmatprep.subr.mxu0 0.0
        %547 = vmatpush2.msra.mxu0 0.0
        %548 = vmatprep.subr.mxu0 0.0
        %549 = vmatpush2.msra.mxu0 0.0
        %550 = vmatprep.subr.mxu0 0.0
        %551 = vmatpush2.msra.mxu0 0.0
        %552 = vmatprep.subr.mxu0 0.0
        %553 = vmatpush2.msra.mxu0 0.0
        %554 = vmatprep.subr.mxu0 0.0
        %555 = vmatpush2.msra.mxu0 0.0
        %556 = vmatprep.mubr.f32.mxu0 0.0
        %v557 = vand.u32 %v263, 4294901760
        %v558 = vsub.f32 %v263, %v557
        %v559 = vand.u32 %v558, 4294901760
        %560 = vmatmul.mubr.f32.gmra.mxu0 %v559
        %v561 = vpop.f32.mrf.mxu0
        %v562 = vadd.f32 %v488, %v561
        %v563 = vpop.f32.mrf.mxu0
        %564 = vdwg.mxu0
        %565 = vmatprep.subr.mxu0 0.0
        %566 = vmatpush1.msra.mxu0 0.0
        %567 = vmatprep.subr.mxu0 0.0
        %568 = vmatpush1.msra.mxu0 0.0
        %569 = vmatprep.subr.mxu0 0.0
        %570 = vmatpush1.msra.mxu0 0.0
        %571 = vmatprep.subr.mxu0 0.0
        %572 = vmatpush1.msra.mxu0 0.0
        %573 = vmatprep.subr.mxu0 0.0
        %574 = vmatpush1.msra.mxu0 0.0
        %575 = vmatprep.subr.mxu0 0.0
        %576 = vmatpush1.msra.mxu0 0.0
        %577 = vmatprep.subr.mxu0 0.0
        %578 = vmatpush1.msra.mxu0 0.0
        %579 = vmatprep.subr.mxu0 0.0
        %580 = vmatpush1.msra.mxu0 0.0
        %581 = vmatprep.subr.mxu0 0.0
        %582 = vmatpush1.msra.mxu0 0.0
        %583 = vmatprep.subr.mxu0 0.0
        %584 = vmatpush1.msra.mxu0 0.0
        %585 = vmatprep.subr.mxu0 0.0
        %586 = vmatpush1.msra.mxu0 0.0
        %587 = vmatprep.subr.mxu0 0.0
        %588 = vmatpush1.msra.mxu0 0.0
        %589 = vmatprep.subr.mxu0 0.0
        %590 = vmatpush1.msra.mxu0 0.0
        %591 = vmatprep.subr.mxu0 0.0
        %592 = vmatpush1.msra.mxu0 0.0
        %593 = vmatprep.subr.mxu0 0.0
        %594 = vmatpush1.msra.mxu0 0.0
        %595 = vmatprep.subr.mxu0 0.0
        %v596 = vand.u32 %v260, 4294901760
        %v597 = vsub.f32 %v260, %v596
        %v598 = vand.u32 %v597, 4294901760
        %599 = vmatpush1.msra.mxu0 %v598
        %600 = vmatprep.subr.mxu0 0.0
        %601 = vmatpush2.msra.mxu0 0.0
        %602 = vmatprep.subr.mxu0 0.0
        %603 = vmatpush2.msra.mxu0 0.0
        %604 = vmatprep.subr.mxu0 0.0
        %605 = vmatpush2.msra.mxu0 0.0
        %606 = vmatprep.subr.mxu0 0.0
        %607 = vmatpush2.msra.mxu0 0.0
        %608 = vmatprep.subr.mxu0 0.0
        %609 = vmatpush2.msra.mxu0 0.0
        %610 = vmatprep.subr.mxu0 0.0
        %611 = vmatpush2.msra.mxu0 0.0
        %612 = vmatprep.subr.mxu0 0.0
        %613 = vmatpush2.msra.mxu0 0.0
        %614 = vmatprep.subr.mxu0 0.0
        %615 = vmatpush2.msra.mxu0 0.0
        %616 = vmatprep.subr.mxu0 0.0
        %617 = vmatpush2.msra.mxu0 0.0
        %618 = vmatprep.subr.mxu0 0.0
        %619 = vmatpush2.msra.mxu0 0.0
        %620 = vmatprep.subr.mxu0 0.0
        %621 = vmatpush2.msra.mxu0 0.0
        %622 = vmatprep.subr.mxu0 0.0
        %623 = vmatpush2.msra.mxu0 0.0
        %624 = vmatprep.subr.mxu0 0.0
        %625 = vmatpush2.msra.mxu0 0.0
        %626 = vmatprep.subr.mxu0 0.0
        %627 = vmatpush2.msra.mxu0 0.0
        %628 = vmatprep.subr.mxu0 0.0
        %629 = vmatpush2.msra.mxu0 0.0
        %630 = vmatprep.subr.mxu0 0.0
        %631 = vmatpush2.msra.mxu0 0.0
        %632 = vmatprep.mubr.f32.mxu0 0.0
        %v633 = vand.u32 %v263, 4294901760
        %634 = vmatmul.mubr.f32.gmra.mxu0 %v633
        %v635 = vpop.f32.mrf.mxu0
        %v636 = vadd.f32 %v562, %v635
        %v637 = vpop.f32.mrf.mxu0
        %638 = vdwg.mxu0
        %639 = vmatprep.subr.mxu0 0.0
        %640 = vmatpush1.msra.mxu0 0.0
        %641 = vmatprep.subr.mxu0 0.0
        %642 = vmatpush1.msra.mxu0 0.0
        %643 = vmatprep.subr.mxu0 0.0
        %644 = vmatpush1.msra.mxu0 0.0
        %645 = vmatprep.subr.mxu0 0.0
        %646 = vmatpush1.msra.mxu0 0.0
        %647 = vmatprep.subr.mxu0 0.0
        %648 = vmatpush1.msra.mxu0 0.0
        %649 = vmatprep.subr.mxu0 0.0
        %650 = vmatpush1.msra.mxu0 0.0
        %651 = vmatprep.subr.mxu0 0.0
        %652 = vmatpush1.msra.mxu0 0.0
        %653 = vmatprep.subr.mxu0 0.0
        %654 = vmatpush1.msra.mxu0 0.0
        %655 = vmatprep.subr.mxu0 0.0
        %656 = vmatpush1.msra.mxu0 0.0
        %657 = vmatprep.subr.mxu0 0.0
        %658 = vmatpush1.msra.mxu0 0.0
        %659 = vmatprep.subr.mxu0 0.0
        %660 = vmatpush1.msra.mxu0 0.0
        %661 = vmatprep.subr.mxu0 0.0
        %662 = vmatpush1.msra.mxu0 0.0
        %663 = vmatprep.subr.mxu0 0.0
        %664 = vmatpush1.msra.mxu0 0.0
        %665 = vmatprep.subr.mxu0 0.0
        %666 = vmatpush1.msra.mxu0 0.0
        %667 = vmatprep.subr.mxu0 0.0
        %668 = vmatpush1.msra.mxu0 0.0
        %669 = vmatprep.subr.mxu0 0.0
        %v670 = vand.u32 %v260, 4294901760
        %671 = vmatpush1.msra.mxu0 %v670
        %672 = vmatprep.subr.mxu0 0.0
        %673 = vmatpush2.msra.mxu0 0.0
        %674 = vmatprep.subr.mxu0 0.0
        %675 = vmatpush2.msra.mxu0 0.0
        %676 = vmatprep.subr.mxu0 0.0
        %677 = vmatpush2.msra.mxu0 0.0
        %678 = vmatprep.subr.mxu0 0.0
        %679 = vmatpush2.msra.mxu0 0.0
        %680 = vmatprep.subr.mxu0 0.0
        %681 = vmatpush2.msra.mxu0 0.0
        %682 = vmatprep.subr.mxu0 0.0
        %683 = vmatpush2.msra.mxu0 0.0
        %684 = vmatprep.subr.mxu0 0.0
        %685 = vmatpush2.msra.mxu0 0.0
        %686 = vmatprep.subr.mxu0 0.0
        %687 = vmatpush2.msra.mxu0 0.0
        %688 = vmatprep.subr.mxu0 0.0
        %689 = vmatpush2.msra.mxu0 0.0
        %690 = vmatprep.subr.mxu0 0.0
        %691 = vmatpush2.msra.mxu0 0.0
        %692 = vmatprep.subr.mxu0 0.0
        %693 = vmatpush2.msra.mxu0 0.0
        %694 = vmatprep.subr.mxu0 0.0
        %695 = vmatpush2.msra.mxu0 0.0
        %696 = vmatprep.subr.mxu0 0.0
        %697 = vmatpush2.msra.mxu0 0.0
        %698 = vmatprep.subr.mxu0 0.0
        %699 = vmatpush2.msra.mxu0 0.0
        %700 = vmatprep.subr.mxu0 0.0
        %701 = vmatpush2.msra.mxu0 0.0
        %702 = vmatprep.subr.mxu0 0.0
        %703 = vmatpush2.msra.mxu0 0.0
        %704 = vmatprep.mubr.f32.mxu0 0.0
        %v705 = vand.u32 %v263, 4294901760
        %706 = vmatmul.mubr.f32.gmra.mxu0 %v705
        %v707 = vpop.f32.mrf.mxu0
        %v708 = vadd.f32 %v636, %v707
        %v709 = vpop.f32.mrf.mxu0
        %710 = vdwg.mxu0
        %v711 = vsub.f32 %v213, %v708
        %v712 = vmul.f32 %v711, 1.442695
        %v713 = vpow.pop %v712
        %v714 = vld [vmem:[#allocation7] sm:$0xff]
        %v715 = vld [vmem:[#allocation7 + $0x8] sm:$0xff]
        %v716 = vld [vmem:[#allocation7 + $0x10] sm:$0xff]
        %v717 = vld [vmem:[#allocation7 + $0x18] sm:$0xff]
        %v718 = vld [vmem:[#allocation7 + $0x20] sm:$0xff]
        %v719 = vld [vmem:[#allocation7 + $0x28] sm:$0xff]
        %v720 = vld [vmem:[#allocation7 + $0x30] sm:$0xff]
        %v721 = vld [vmem:[#allocation7 + $0x38] sm:$0xff]
        %v722 = vld [vmem:[#allocation7 + $0x40] sm:$0xff]
        %v723 = vld [vmem:[#allocation7 + $0x48] sm:$0xff]
        %v724 = vld [vmem:[#allocation7 + $0x50] sm:$0xff]
        %v725 = vld [vmem:[#allocation7 + $0x58] sm:$0xff]
        %v726 = vld [vmem:[#allocation7 + $0x60] sm:$0xff]
        %v727 = vld [vmem:[#allocation7 + $0x68] sm:$0xff]
        %v728 = vld [vmem:[#allocation7 + $0x70] sm:$0xff]
        %v729 = vld [vmem:[#allocation7 + $0x78] sm:$0xff]
        %730 = vmatprep.subr.mxu0 0.0
        %v731 = vand.u32 %v729, 4294901760
        %732 = vmatpush1.msra.mxu0 %v731
        %733 = vmatprep.subr.mxu0 0.0
        %v734 = vand.u32 %v728, 4294901760
        %735 = vmatpush1.msra.mxu0 %v734
        %736 = vmatprep.subr.mxu0 0.0
        %v737 = vand.u32 %v727, 4294901760
        %738 = vmatpush1.msra.mxu0 %v737
        %739 = vmatprep.subr.mxu0 0.0
        %v740 = vand.u32 %v726, 4294901760
        %741 = vmatpush1.msra.mxu0 %v740
        %742 = vmatprep.subr.mxu0 0.0
        %v743 = vand.u32 %v725, 4294901760
        %744 = vmatpush1.msra.mxu0 %v743
        %745 = vmatprep.subr.mxu0 0.0
        %v746 = vand.u32 %v724, 4294901760
        %747 = vmatpush1.msra.mxu0 %v746
        %748 = vmatprep.subr.mxu0 0.0
        %v749 = vand.u32 %v723, 4294901760
        %750 = vmatpush1.msra.mxu0 %v749
        %751 = vmatprep.subr.mxu0 0.0
        %v752 = vand.u32 %v722, 4294901760
        %753 = vmatpush1.msra.mxu0 %v752
        %754 = vmatprep.subr.mxu0 0.0
        %v755 = vand.u32 %v721, 4294901760
        %756 = vmatpush1.msra.mxu0 %v755
        %757 = vmatprep.subr.mxu0 0.0
        %v758 = vand.u32 %v720, 4294901760
        %759 = vmatpush1.msra.mxu0 %v758
        %760 = vmatprep.subr.mxu0 0.0
        %v761 = vand.u32 %v719, 4294901760
        %762 = vmatpush1.msra.mxu0 %v761
        %763 = vmatprep.subr.mxu0 0.0
        %v764 = vand.u32 %v718, 4294901760
        %765 = vmatpush1.msra.mxu0 %v764
        %766 = vmatprep.subr.mxu0 0.0
        %v767 = vand.u32 %v717, 4294901760
        %768 = vmatpush1.msra.mxu0 %v767
        %769 = vmatprep.subr.mxu0 0.0
        %v770 = vand.u32 %v716, 4294901760
        %771 = vmatpush1.msra.mxu0 %v770
        %772 = vmatprep.subr.mxu0 0.0
        %v773 = vand.u32 %v715, 4294901760
        %774 = vmatpush1.msra.mxu0 %v773
        %775 = vmatprep.subr.mxu0 0.0
        %v776 = vand.u32 %v714, 4294901760
        %777 = vmatpush1.msra.mxu0 %v776
        %778 = vmatprep.subr.mxu0 0.0
        %779 = vmatpush2.msra.mxu0 0.0
        %780 = vmatprep.subr.mxu0 0.0
        %781 = vmatpush2.msra.mxu0 0.0
        %782 = vmatprep.subr.mxu0 0.0
        %783 = vmatpush2.msra.mxu0 0.0
        %784 = vmatprep.subr.mxu0 0.0
        %785 = vmatpush2.msra.mxu0 0.0
        %786 = vmatprep.subr.mxu0 0.0
        %787 = vmatpush2.msra.mxu0 0.0
        %788 = vmatprep.subr.mxu0 0.0
        %789 = vmatpush2.msra.mxu0 0.0
        %790 = vmatprep.subr.mxu0 0.0
        %791 = vmatpush2.msra.mxu0 0.0
        %792 = vmatprep.subr.mxu0 0.0
        %793 = vmatpush2.msra.mxu0 0.0
        %794 = vmatprep.subr.mxu0 0.0
        %795 = vmatpush2.msra.mxu0 0.0
        %796 = vmatprep.subr.mxu0 0.0
        %797 = vmatpush2.msra.mxu0 0.0
        %798 = vmatprep.subr.mxu0 0.0
        %799 = vmatpush2.msra.mxu0 0.0
        %800 = vmatprep.subr.mxu0 0.0
        %801 = vmatpush2.msra.mxu0 0.0
        %802 = vmatprep.subr.mxu0 0.0
        %803 = vmatpush2.msra.mxu0 0.0
        %804 = vmatprep.subr.mxu0 0.0
        %805 = vmatpush2.msra.mxu0 0.0
        %806 = vmatprep.subr.mxu0 0.0
        %807 = vmatpush2.msra.mxu0 0.0
        %808 = vmatprep.subr.mxu0 0.0
        %809 = vmatpush2.msra.mxu0 0.0
        %810 = vmatprep.mubr.f32.mxu0 0.0
        %v811 = vand.u32 %v713, 4294901760
        %v812 = vsub.f32 %v713, %v811
        %v813 = vand.u32 %v812, 4294901760
        %v814 = vsub.f32 %v812, %v813
        %v815 = vand.u32 %v814, 4294901760
        %816 = vmatmul.mubr.f32.gmra.mxu0 %v815
        %v817 = vpop.f32.mrf.mxu0
        %v818 = vadd.f32 0.0, %v817
        %v819 = vpop.f32.mrf.mxu0
        %820 = vdwg.mxu0
        %821 = vmatprep.subr.mxu0 0.0
        %v822 = vand.u32 %v729, 4294901760
        %v823 = vsub.f32 %v729, %v822
        %v824 = vand.u32 %v823, 4294901760
        %v825 = vsub.f32 %v823, %v824
        %v826 = vand.u32 %v825, 4294901760
        %827 = vmatpush1.msra.mxu0 %v826
        %828 = vmatprep.subr.mxu0 0.0
        %v829 = vand.u32 %v728, 4294901760
        %v830 = vsub.f32 %v728, %v829
        %v831 = vand.u32 %v830, 4294901760
        %v832 = vsub.f32 %v830, %v831
        %v833 = vand.u32 %v832, 4294901760
        %834 = vmatpush1.msra.mxu0 %v833
        %835 = vmatprep.subr.mxu0 0.0
        %v836 = vand.u32 %v727, 4294901760
        %v837 = vsub.f32 %v727, %v836
        %v838 = vand.u32 %v837, 4294901760
        %v839 = vsub.f32 %v837, %v838
        %v840 = vand.u32 %v839, 4294901760
        %841 = vmatpush1.msra.mxu0 %v840
        %842 = vmatprep.subr.mxu0 0.0
        %v843 = vand.u32 %v726, 4294901760
        %v844 = vsub.f32 %v726, %v843
        %v845 = vand.u32 %v844, 4294901760
        %v846 = vsub.f32 %v844, %v845
        %v847 = vand.u32 %v846, 4294901760
        %848 = vmatpush1.msra.mxu0 %v847
        %849 = vmatprep.subr.mxu0 0.0
        %v850 = vand.u32 %v725, 4294901760
        %v851 = vsub.f32 %v725, %v850
        %v852 = vand.u32 %v851, 4294901760
        %v853 = vsub.f32 %v851, %v852
        %v854 = vand.u32 %v853, 4294901760
        %855 = vmatpush1.msra.mxu0 %v854
        %856 = vmatprep.subr.mxu0 0.0
        %v857 = vand.u32 %v724, 4294901760
        %v858 = vsub.f32 %v724, %v857
        %v859 = vand.u32 %v858, 4294901760
        %v860 = vsub.f32 %v858, %v859
        %v861 = vand.u32 %v860, 4294901760
        %862 = vmatpush1.msra.mxu0 %v861
        %863 = vmatprep.subr.mxu0 0.0
        %v864 = vand.u32 %v723, 4294901760
        %v865 = vsub.f32 %v723, %v864
        %v866 = vand.u32 %v865, 4294901760
        %v867 = vsub.f32 %v865, %v866
        %v868 = vand.u32 %v867, 4294901760
        %869 = vmatpush1.msra.mxu0 %v868
        %870 = vmatprep.subr.mxu0 0.0
        %v871 = vand.u32 %v722, 4294901760
        %v872 = vsub.f32 %v722, %v871
        %v873 = vand.u32 %v872, 4294901760
        %v874 = vsub.f32 %v872, %v873
        %v875 = vand.u32 %v874, 4294901760
        %876 = vmatpush1.msra.mxu0 %v875
        %877 = vmatprep.subr.mxu0 0.0
        %v878 = vand.u32 %v721, 4294901760
        %v879 = vsub.f32 %v721, %v878
        %v880 = vand.u32 %v879, 4294901760
        %v881 = vsub.f32 %v879, %v880
        %v882 = vand.u32 %v881, 4294901760
        %883 = vmatpush1.msra.mxu0 %v882
        %884 = vmatprep.subr.mxu0 0.0
        %v885 = vand.u32 %v720, 4294901760
        %v886 = vsub.f32 %v720, %v885
        %v887 = vand.u32 %v886, 4294901760
        %v888 = vsub.f32 %v886, %v887
        %v889 = vand.u32 %v888, 4294901760
        %890 = vmatpush1.msra.mxu0 %v889
        %891 = vmatprep.subr.mxu0 0.0
        %v892 = vand.u32 %v719, 4294901760
        %v893 = vsub.f32 %v719, %v892
        %v894 = vand.u32 %v893, 4294901760
        %v895 = vsub.f32 %v893, %v894
        %v896 = vand.u32 %v895, 4294901760
        %897 = vmatpush1.msra.mxu0 %v896
        %898 = vmatprep.subr.mxu0 0.0
        %v899 = vand.u32 %v718, 4294901760
        %v900 = vsub.f32 %v718, %v899
        %v901 = vand.u32 %v900, 4294901760
        %v902 = vsub.f32 %v900, %v901
        %v903 = vand.u32 %v902, 4294901760
        %904 = vmatpush1.msra.mxu0 %v903
        %905 = vmatprep.subr.mxu0 0.0
        %v906 = vand.u32 %v717, 4294901760
        %v907 = vsub.f32 %v717, %v906
        %v908 = vand.u32 %v907, 4294901760
        %v909 = vsub.f32 %v907, %v908
        %v910 = vand.u32 %v909, 4294901760
        %911 = vmatpush1.msra.mxu0 %v910
        %912 = vmatprep.subr.mxu0 0.0
        %v913 = vand.u32 %v716, 4294901760
        %v914 = vsub.f32 %v716, %v913
        %v915 = vand.u32 %v914, 4294901760
        %v916 = vsub.f32 %v914, %v915
        %v917 = vand.u32 %v916, 4294901760
        %918 = vmatpush1.msra.mxu0 %v917
        %919 = vmatprep.subr.mxu0 0.0
        %v920 = vand.u32 %v715, 4294901760
        %v921 = vsub.f32 %v715, %v920
        %v922 = vand.u32 %v921, 4294901760
        %v923 = vsub.f32 %v921, %v922
        %v924 = vand.u32 %v923, 4294901760
        %925 = vmatpush1.msra.mxu0 %v924
        %926 = vmatprep.subr.mxu0 0.0
        %v927 = vand.u32 %v714, 4294901760
        %v928 = vsub.f32 %v714, %v927
        %v929 = vand.u32 %v928, 4294901760
        %v930 = vsub.f32 %v928, %v929
        %v931 = vand.u32 %v930, 4294901760
        %932 = vmatpush1.msra.mxu0 %v931
        %933 = vmatprep.subr.mxu0 0.0
        %934 = vmatpush2.msra.mxu0 0.0
        %935 = vmatprep.subr.mxu0 0.0
        %936 = vmatpush2.msra.mxu0 0.0
        %937 = vmatprep.subr.mxu0 0.0
        %938 = vmatpush2.msra.mxu0 0.0
        %939 = vmatprep.subr.mxu0 0.0
        %940 = vmatpush2.msra.mxu0 0.0
        %941 = vmatprep.subr.mxu0 0.0
        %942 = vmatpush2.msra.mxu0 0.0
        %943 = vmatprep.subr.mxu0 0.0
        %944 = vmatpush2.msra.mxu0 0.0
        %945 = vmatprep.subr.mxu0 0.0
        %946 = vmatpush2.msra.mxu0 0.0
        %947 = vmatprep.subr.mxu0 0.0
        %948 = vmatpush2.msra.mxu0 0.0
        %949 = vmatprep.subr.mxu0 0.0
        %950 = vmatpush2.msra.mxu0 0.0
        %951 = vmatprep.subr.mxu0 0.0
        %952 = vmatpush2.msra.mxu0 0.0
        %953 = vmatprep.subr.mxu0 0.0
        %954 = vmatpush2.msra.mxu0 0.0
        %955 = vmatprep.subr.mxu0 0.0
        %956 = vmatpush2.msra.mxu0 0.0
        %957 = vmatprep.subr.mxu0 0.0
        %958 = vmatpush2.msra.mxu0 0.0
        %959 = vmatprep.subr.mxu0 0.0
        %960 = vmatpush2.msra.mxu0 0.0
        %961 = vmatprep.subr.mxu0 0.0
        %962 = vmatpush2.msra.mxu0 0.0
        %963 = vmatprep.subr.mxu0 0.0
        %964 = vmatpush2.msra.mxu0 0.0
        %965 = vmatprep.mubr.f32.mxu0 0.0
        %v966 = vand.u32 %v713, 4294901760
        %967 = vmatmul.mubr.f32.gmra.mxu0 %v966
        %v968 = vpop.f32.mrf.mxu0
        %v969 = vadd.f32 %v818, %v968
        %v970 = vpop.f32.mrf.mxu0
        %971 = vdwg.mxu0
        %972 = vmatprep.subr.mxu0 0.0
        %v973 = vand.u32 %v729, 4294901760
        %v974 = vsub.f32 %v729, %v973
        %975 = vmatpush1.msra.mxu0 %v974
        %976 = vmatprep.subr.mxu0 0.0
        %v977 = vand.u32 %v728, 4294901760
        %v978 = vsub.f32 %v728, %v977
        %979 = vmatpush1.msra.mxu0 %v978
        %980 = vmatprep.subr.mxu0 0.0
        %v981 = vand.u32 %v727, 4294901760
        %v982 = vsub.f32 %v727, %v981
        %983 = vmatpush1.msra.mxu0 %v982
        %984 = vmatprep.subr.mxu0 0.0
        %v985 = vand.u32 %v726, 4294901760
        %v986 = vsub.f32 %v726, %v985
        %987 = vmatpush1.msra.mxu0 %v986
        %988 = vmatprep.subr.mxu0 0.0
        %v989 = vand.u32 %v725, 4294901760
        %v990 = vsub.f32 %v725, %v989
        %991 = vmatpush1.msra.mxu0 %v990
        %992 = vmatprep.subr.mxu0 0.0
        %v993 = vand.u32 %v724, 4294901760
        %v994 = vsub.f32 %v724, %v993
        %995 = vmatpush1.msra.mxu0 %v994
        %996 = vmatprep.subr.mxu0 0.0
        %v997 = vand.u32 %v723, 4294901760
        %v998 = vsub.f32 %v723, %v997
        %999 = vmatpush1.msra.mxu0 %v998
        %1000 = vmatprep.subr.mxu0 0.0
        %v1001 = vand.u32 %v722, 4294901760
        %v1002 = vsub.f32 %v722, %v1001
        %1003 = vmatpush1.msra.mxu0 %v1002
        %1004 = vmatprep.subr.mxu0 0.0
        %v1005 = vand.u32 %v721, 4294901760
        %v1006 = vsub.f32 %v721, %v1005
        %1007 = vmatpush1.msra.mxu0 %v1006
        %1008 = vmatprep.subr.mxu0 0.0
        %v1009 = vand.u32 %v720, 4294901760
        %v1010 = vsub.f32 %v720, %v1009
        %1011 = vmatpush1.msra.mxu0 %v1010
        %1012 = vmatprep.subr.mxu0 0.0
        %v1013 = vand.u32 %v719, 4294901760
        %v1014 = vsub.f32 %v719, %v1013
        %1015 = vmatpush1.msra.mxu0 %v1014
        %1016 = vmatprep.subr.mxu0 0.0
        %v1017 = vand.u32 %v718, 4294901760
        %v1018 = vsub.f32 %v718, %v1017
        %1019 = vmatpush1.msra.mxu0 %v1018
        %1020 = vmatprep.subr.mxu0 0.0
        %v1021 = vand.u32 %v717, 4294901760
        %v1022 = vsub.f32 %v717, %v1021
        %1023 = vmatpush1.msra.mxu0 %v1022
        %1024 = vmatprep.subr.mxu0 0.0
        %v1025 = vand.u32 %v716, 4294901760
        %v1026 = vsub.f32 %v716, %v1025
        %1027 = vmatpush1.msra.mxu0 %v1026
        %1028 = vmatprep.subr.mxu0 0.0
        %v1029 = vand.u32 %v715, 4294901760
        %v1030 = vsub.f32 %v715, %v1029
        %1031 = vmatpush1.msra.mxu0 %v1030
        %1032 = vmatprep.subr.mxu0 0.0
        %v1033 = vand.u32 %v714, 4294901760
        %v1034 = vsub.f32 %v714, %v1033
        %1035 = vmatpush1.msra.mxu0 %v1034
        %1036 = vmatprep.subr.mxu0 0.0
        %1037 = vmatpush2.msra.mxu0 0.0
        %1038 = vmatprep.subr.mxu0 0.0
        %1039 = vmatpush2.msra.mxu0 0.0
        %1040 = vmatprep.subr.mxu0 0.0
        %1041 = vmatpush2.msra.mxu0 0.0
        %1042 = vmatprep.subr.mxu0 0.0
        %1043 = vmatpush2.msra.mxu0 0.0
        %1044 = vmatprep.subr.mxu0 0.0
        %1045 = vmatpush2.msra.mxu0 0.0
        %1046 = vmatprep.subr.mxu0 0.0
        %1047 = vmatpush2.msra.mxu0 0.0
        %1048 = vmatprep.subr.mxu0 0.0
        %1049 = vmatpush2.msra.mxu0 0.0
        %1050 = vmatprep.subr.mxu0 0.0
        %1051 = vmatpush2.msra.mxu0 0.0
        %1052 = vmatprep.subr.mxu0 0.0
        %1053 = vmatpush2.msra.mxu0 0.0
        %1054 = vmatprep.subr.mxu0 0.0
        %1055 = vmatpush2.msra.mxu0 0.0
        %1056 = vmatprep.subr.mxu0 0.0
        %1057 = vmatpush2.msra.mxu0 0.0
        %1058 = vmatprep.subr.mxu0 0.0
        %1059 = vmatpush2.msra.mxu0 0.0
        %1060 = vmatprep.subr.mxu0 0.0
        %1061 = vmatpush2.msra.mxu0 0.0
        %1062 = vmatprep.subr.mxu0 0.0
        %1063 = vmatpush2.msra.mxu0 0.0
        %1064 = vmatprep.subr.mxu0 0.0
        %1065 = vmatpush2.msra.mxu0 0.0
        %1066 = vmatprep.subr.mxu0 0.0
        %1067 = vmatpush2.msra.mxu0 0.0
        %1068 = vmatprep.mubr.f32.mxu0 0.0
        %v1069 = vand.u32 %v713, 4294901760
        %v1070 = vsub.f32 %v713, %v1069
        %1071 = vmatmul.mubr.f32.gmra.mxu0 %v1070
        %v1072 = vpop.f32.mrf.mxu0
        %v1073 = vadd.f32 %v969, %v1072
        %v1074 = vpop.f32.mrf.mxu0
        %1075 = vdwg.mxu0
        %1076 = vmatprep.subr.mxu0 0.0
        %v1077 = vand.u32 %v729, 4294901760
        %1078 = vmatpush1.msra.mxu0 %v1077
        %1079 = vmatprep.subr.mxu0 0.0
        %v1080 = vand.u32 %v728, 4294901760
        %1081 = vmatpush1.msra.mxu0 %v1080
        %1082 = vmatprep.subr.mxu0 0.0
        %v1083 = vand.u32 %v727, 4294901760
        %1084 = vmatpush1.msra.mxu0 %v1083
        %1085 = vmatprep.subr.mxu0 0.0
        %v1086 = vand.u32 %v726, 4294901760
        %1087 = vmatpush1.msra.mxu0 %v1086
        %1088 = vmatprep.subr.mxu0 0.0
        %v1089 = vand.u32 %v725, 4294901760
        %1090 = vmatpush1.msra.mxu0 %v1089
        %1091 = vmatprep.subr.mxu0 0.0
        %v1092 = vand.u32 %v724, 4294901760
        %1093 = vmatpush1.msra.mxu0 %v1092
        %1094 = vmatprep.subr.mxu0 0.0
        %v1095 = vand.u32 %v723, 4294901760
        %1096 = vmatpush1.msra.mxu0 %v1095
        %1097 = vmatprep.subr.mxu0 0.0
        %v1098 = vand.u32 %v722, 4294901760
        %1099 = vmatpush1.msra.mxu0 %v1098
        %1100 = vmatprep.subr.mxu0 0.0
        %v1101 = vand.u32 %v721, 4294901760
        %1102 = vmatpush1.msra.mxu0 %v1101
        %1103 = vmatprep.subr.mxu0 0.0
        %v1104 = vand.u32 %v720, 4294901760
        %1105 = vmatpush1.msra.mxu0 %v1104
        %1106 = vmatprep.subr.mxu0 0.0
        %v1107 = vand.u32 %v719, 4294901760
        %1108 = vmatpush1.msra.mxu0 %v1107
        %1109 = vmatprep.subr.mxu0 0.0
        %v1110 = vand.u32 %v718, 4294901760
        %1111 = vmatpush1.msra.mxu0 %v1110
        %1112 = vmatprep.subr.mxu0 0.0
        %v1113 = vand.u32 %v717, 4294901760
        %1114 = vmatpush1.msra.mxu0 %v1113
        %1115 = vmatprep.subr.mxu0 0.0
        %v1116 = vand.u32 %v716, 4294901760
        %1117 = vmatpush1.msra.mxu0 %v1116
        %1118 = vmatprep.subr.mxu0 0.0
        %v1119 = vand.u32 %v715, 4294901760
        %1120 = vmatpush1.msra.mxu0 %v1119
        %1121 = vmatprep.subr.mxu0 0.0
        %v1122 = vand.u32 %v714, 4294901760
        %1123 = vmatpush1.msra.mxu0 %v1122
        %1124 = vmatprep.subr.mxu0 0.0
        %1125 = vmatpush2.msra.mxu0 0.0
        %1126 = vmatprep.subr.mxu0 0.0
        %1127 = vmatpush2.msra.mxu0 0.0
        %1128 = vmatprep.subr.mxu0 0.0
        %1129 = vmatpush2.msra.mxu0 0.0
        %1130 = vmatprep.subr.mxu0 0.0
        %1131 = vmatpush2.msra.mxu0 0.0
        %1132 = vmatprep.subr.mxu0 0.0
        %1133 = vmatpush2.msra.mxu0 0.0
        %1134 = vmatprep.subr.mxu0 0.0
        %1135 = vmatpush2.msra.mxu0 0.0
        %1136 = vmatprep.subr.mxu0 0.0
        %1137 = vmatpush2.msra.mxu0 0.0
        %1138 = vmatprep.subr.mxu0 0.0
        %1139 = vmatpush2.msra.mxu0 0.0
        %1140 = vmatprep.subr.mxu0 0.0
        %1141 = vmatpush2.msra.mxu0 0.0
        %1142 = vmatprep.subr.mxu0 0.0
        %1143 = vmatpush2.msra.mxu0 0.0
        %1144 = vmatprep.subr.mxu0 0.0
        %1145 = vmatpush2.msra.mxu0 0.0
        %1146 = vmatprep.subr.mxu0 0.0
        %1147 = vmatpush2.msra.mxu0 0.0
        %1148 = vmatprep.subr.mxu0 0.0
        %1149 = vmatpush2.msra.mxu0 0.0
        %1150 = vmatprep.subr.mxu0 0.0
        %1151 = vmatpush2.msra.mxu0 0.0
        %1152 = vmatprep.subr.mxu0 0.0
        %1153 = vmatpush2.msra.mxu0 0.0
        %1154 = vmatprep.subr.mxu0 0.0
        %1155 = vmatpush2.msra.mxu0 0.0
        %1156 = vmatprep.mubr.f32.mxu0 0.0
        %v1157 = vand.u32 %v713, 4294901760
        %v1158 = vsub.f32 %v713, %v1157
        %v1159 = vand.u32 %v1158, 4294901760
        %1160 = vmatmul.mubr.f32.gmra.mxu0 %v1159
        %v1161 = vpop.f32.mrf.mxu0
        %v1162 = vadd.f32 %v1073, %v1161
        %v1163 = vpop.f32.mrf.mxu0
        %1164 = vdwg.mxu0
        %1165 = vmatprep.subr.mxu0 0.0
        %v1166 = vand.u32 %v729, 4294901760
        %v1167 = vsub.f32 %v729, %v1166
        %v1168 = vand.u32 %v1167, 4294901760
        %1169 = vmatpush1.msra.mxu0 %v1168
        %1170 = vmatprep.subr.mxu0 0.0
        %v1171 = vand.u32 %v728, 4294901760
        %v1172 = vsub.f32 %v728, %v1171
        %v1173 = vand.u32 %v1172, 4294901760
        %1174 = vmatpush1.msra.mxu0 %v1173
        %1175 = vmatprep.subr.mxu0 0.0
        %v1176 = vand.u32 %v727, 4294901760
        %v1177 = vsub.f32 %v727, %v1176
        %v1178 = vand.u32 %v1177, 4294901760
        %1179 = vmatpush1.msra.mxu0 %v1178
        %1180 = vmatprep.subr.mxu0 0.0
        %v1181 = vand.u32 %v726, 4294901760
        %v1182 = vsub.f32 %v726, %v1181
        %v1183 = vand.u32 %v1182, 4294901760
        %1184 = vmatpush1.msra.mxu0 %v1183
        %1185 = vmatprep.subr.mxu0 0.0
        %v1186 = vand.u32 %v725, 4294901760
        %v1187 = vsub.f32 %v725, %v1186
        %v1188 = vand.u32 %v1187, 4294901760
        %1189 = vmatpush1.msra.mxu0 %v1188
        %1190 = vmatprep.subr.mxu0 0.0
        %v1191 = vand.u32 %v724, 4294901760
        %v1192 = vsub.f32 %v724, %v1191
        %v1193 = vand.u32 %v1192, 4294901760
        %1194 = vmatpush1.msra.mxu0 %v1193
        %1195 = vmatprep.subr.mxu0 0.0
        %v1196 = vand.u32 %v723, 4294901760
        %v1197 = vsub.f32 %v723, %v1196
        %v1198 = vand.u32 %v1197, 4294901760
        %1199 = vmatpush1.msra.mxu0 %v1198
        %1200 = vmatprep.subr.mxu0 0.0
        %v1201 = vand.u32 %v722, 4294901760
        %v1202 = vsub.f32 %v722, %v1201
        %v1203 = vand.u32 %v1202, 4294901760
        %1204 = vmatpush1.msra.mxu0 %v1203
        %1205 = vmatprep.subr.mxu0 0.0
        %v1206 = vand.u32 %v721, 4294901760
        %v1207 = vsub.f32 %v721, %v1206
        %v1208 = vand.u32 %v1207, 4294901760
        %1209 = vmatpush1.msra.mxu0 %v1208
        %1210 = vmatprep.subr.mxu0 0.0
        %v1211 = vand.u32 %v720, 4294901760
        %v1212 = vsub.f32 %v720, %v1211
        %v1213 = vand.u32 %v1212, 4294901760
        %1214 = vmatpush1.msra.mxu0 %v1213
        %1215 = vmatprep.subr.mxu0 0.0
        %v1216 = vand.u32 %v719, 4294901760
        %v1217 = vsub.f32 %v719, %v1216
        %v1218 = vand.u32 %v1217, 4294901760
        %1219 = vmatpush1.msra.mxu0 %v1218
        %1220 = vmatprep.subr.mxu0 0.0
        %v1221 = vand.u32 %v718, 4294901760
        %v1222 = vsub.f32 %v718, %v1221
        %v1223 = vand.u32 %v1222, 4294901760
        %1224 = vmatpush1.msra.mxu0 %v1223
        %1225 = vmatprep.subr.mxu0 0.0
        %v1226 = vand.u32 %v717, 4294901760
        %v1227 = vsub.f32 %v717, %v1226
        %v1228 = vand.u32 %v1227, 4294901760
        %1229 = vmatpush1.msra.mxu0 %v1228
        %1230 = vmatprep.subr.mxu0 0.0
        %v1231 = vand.u32 %v716, 4294901760
        %v1232 = vsub.f32 %v716, %v1231
        %v1233 = vand.u32 %v1232, 4294901760
        %1234 = vmatpush1.msra.mxu0 %v1233
        %1235 = vmatprep.subr.mxu0 0.0
        %v1236 = vand.u32 %v715, 4294901760
        %v1237 = vsub.f32 %v715, %v1236
        %v1238 = vand.u32 %v1237, 4294901760
        %1239 = vmatpush1.msra.mxu0 %v1238
        %1240 = vmatprep.subr.mxu0 0.0
        %v1241 = vand.u32 %v714, 4294901760
        %v1242 = vsub.f32 %v714, %v1241
        %v1243 = vand.u32 %v1242, 4294901760
        %1244 = vmatpush1.msra.mxu0 %v1243
        %1245 = vmatprep.subr.mxu0 0.0
        %1246 = vmatpush2.msra.mxu0 0.0
        %1247 = vmatprep.subr.mxu0 0.0
        %1248 = vmatpush2.msra.mxu0 0.0
        %1249 = vmatprep.subr.mxu0 0.0
        %1250 = vmatpush2.msra.mxu0 0.0
        %1251 = vmatprep.subr.mxu0 0.0
        %1252 = vmatpush2.msra.mxu0 0.0
        %1253 = vmatprep.subr.mxu0 0.0
        %1254 = vmatpush2.msra.mxu0 0.0
        %1255 = vmatprep.subr.mxu0 0.0
        %1256 = vmatpush2.msra.mxu0 0.0
        %1257 = vmatprep.subr.mxu0 0.0
        %1258 = vmatpush2.msra.mxu0 0.0
        %1259 = vmatprep.subr.mxu0 0.0
        %1260 = vmatpush2.msra.mxu0 0.0
        %1261 = vmatprep.subr.mxu0 0.0
        %1262 = vmatpush2.msra.mxu0 0.0
        %1263 = vmatprep.subr.mxu0 0.0
        %1264 = vmatpush2.msra.mxu0 0.0
        %1265 = vmatprep.subr.mxu0 0.0
        %1266 = vmatpush2.msra.mxu0 0.0
        %1267 = vmatprep.subr.mxu0 0.0
        %1268 = vmatpush2.msra.mxu0 0.0
        %1269 = vmatprep.subr.mxu0 0.0
        %1270 = vmatpush2.msra.mxu0 0.0
        %1271 = vmatprep.subr.mxu0 0.0
        %1272 = vmatpush2.msra.mxu0 0.0
        %1273 = vmatprep.subr.mxu0 0.0
        %1274 = vmatpush2.msra.mxu0 0.0
        %1275 = vmatprep.subr.mxu0 0.0
        %1276 = vmatpush2.msra.mxu0 0.0
        %1277 = vmatprep.mubr.f32.mxu0 0.0
        %v1278 = vand.u32 %v713, 4294901760
        %1279 = vmatmul.mubr.f32.gmra.mxu0 %v1278
        %v1280 = vpop.f32.mrf.mxu0
        %v1281 = vadd.f32 %v1162, %v1280
        %v1282 = vpop.f32.mrf.mxu0
        %1283 = vdwg.mxu0
        %1284 = vmatprep.subr.mxu0 0.0
        %v1285 = vand.u32 %v729, 4294901760
        %1286 = vmatpush1.msra.mxu0 %v1285
        %1287 = vmatprep.subr.mxu0 0.0
        %v1288 = vand.u32 %v728, 4294901760
        %1289 = vmatpush1.msra.mxu0 %v1288
        %1290 = vmatprep.subr.mxu0 0.0
        %v1291 = vand.u32 %v727, 4294901760
        %1292 = vmatpush1.msra.mxu0 %v1291
        %1293 = vmatprep.subr.mxu0 0.0
        %v1294 = vand.u32 %v726, 4294901760
        %1295 = vmatpush1.msra.mxu0 %v1294
        %1296 = vmatprep.subr.mxu0 0.0
        %v1297 = vand.u32 %v725, 4294901760
        %1298 = vmatpush1.msra.mxu0 %v1297
        %1299 = vmatprep.subr.mxu0 0.0
        %v1300 = vand.u32 %v724, 4294901760
        %1301 = vmatpush1.msra.mxu0 %v1300
        %1302 = vmatprep.subr.mxu0 0.0
        %v1303 = vand.u32 %v723, 4294901760
        %1304 = vmatpush1.msra.mxu0 %v1303
        %1305 = vmatprep.subr.mxu0 0.0
        %v1306 = vand.u32 %v722, 4294901760
        %1307 = vmatpush1.msra.mxu0 %v1306
        %1308 = vmatprep.subr.mxu0 0.0
        %v1309 = vand.u32 %v721, 4294901760
        %1310 = vmatpush1.msra.mxu0 %v1309
        %1311 = vmatprep.subr.mxu0 0.0
        %v1312 = vand.u32 %v720, 4294901760
        %1313 = vmatpush1.msra.mxu0 %v1312
        %1314 = vmatprep.subr.mxu0 0.0
        %v1315 = vand.u32 %v719, 4294901760
        %1316 = vmatpush1.msra.mxu0 %v1315
        %1317 = vmatprep.subr.mxu0 0.0
        %v1318 = vand.u32 %v718, 4294901760
        %1319 = vmatpush1.msra.mxu0 %v1318
        %1320 = vmatprep.subr.mxu0 0.0
        %v1321 = vand.u32 %v717, 4294901760
        %1322 = vmatpush1.msra.mxu0 %v1321
        %1323 = vmatprep.subr.mxu0 0.0
        %v1324 = vand.u32 %v716, 4294901760
        %1325 = vmatpush1.msra.mxu0 %v1324
        %1326 = vmatprep.subr.mxu0 0.0
        %v1327 = vand.u32 %v715, 4294901760
        %1328 = vmatpush1.msra.mxu0 %v1327
        %1329 = vmatprep.subr.mxu0 0.0
        %v1330 = vand.u32 %v714, 4294901760
        %1331 = vmatpush1.msra.mxu0 %v1330
        %1332 = vmatprep.subr.mxu0 0.0
        %1333 = vmatpush2.msra.mxu0 0.0
        %1334 = vmatprep.subr.mxu0 0.0
        %1335 = vmatpush2.msra.mxu0 0.0
        %1336 = vmatprep.subr.mxu0 0.0
        %1337 = vmatpush2.msra.mxu0 0.0
        %1338 = vmatprep.subr.mxu0 0.0
        %1339 = vmatpush2.msra.mxu0 0.0
        %1340 = vmatprep.subr.mxu0 0.0
        %1341 = vmatpush2.msra.mxu0 0.0
        %1342 = vmatprep.subr.mxu0 0.0
        %1343 = vmatpush2.msra.mxu0 0.0
        %1344 = vmatprep.subr.mxu0 0.0
        %1345 = vmatpush2.msra.mxu0 0.0
        %1346 = vmatprep.subr.mxu0 0.0
        %1347 = vmatpush2.msra.mxu0 0.0
        %1348 = vmatprep.subr.mxu0 0.0
        %1349 = vmatpush2.msra.mxu0 0.0
        %1350 = vmatprep.subr.mxu0 0.0
        %1351 = vmatpush2.msra.mxu0 0.0
        %1352 = vmatprep.subr.mxu0 0.0
        %1353 = vmatpush2.msra.mxu0 0.0
        %1354 = vmatprep.subr.mxu0 0.0
        %1355 = vmatpush2.msra.mxu0 0.0
        %1356 = vmatprep.subr.mxu0 0.0
        %1357 = vmatpush2.msra.mxu0 0.0
        %1358 = vmatprep.subr.mxu0 0.0
        %1359 = vmatpush2.msra.mxu0 0.0
        %1360 = vmatprep.subr.mxu0 0.0
        %1361 = vmatpush2.msra.mxu0 0.0
        %1362 = vmatprep.subr.mxu0 0.0
        %1363 = vmatpush2.msra.mxu0 0.0
        %1364 = vmatprep.mubr.f32.mxu0 0.0
        %v1365 = vand.u32 %v713, 4294901760
        %1366 = vmatmul.mubr.f32.gmra.mxu0 %v1365
        %v1367 = vpop.f32.mrf.mxu0
        %v1368 = vadd.f32 %v1281, %v1367
        %v1369 = vpop.f32.mrf.mxu0
        %1370 = vdwg.mxu0
        %v1371 = vrcp.pop %v1368
        %v1372 = vmul.f32 %v1368, %v1371
        %v1373 = vsub.f32 2.0, %v1372
        %v1374 = vmul.f32 %v1371, %v1373
        %v1375 = vmul.f32 %v713, %v1374
        %1376 = vst [vmem:[%s212] sm:$0xff] %v1375
        %s1377 = sand.u32 %s97, 1
        %s1378 = scalar_lea.sflag [#allocation4], %s1377
        %s1379 = sand.u32 %s97, 1
        %s1380 = smul.addr %s1379, 8
        %s1381 = scalar_lea.vmem [#allocation8], %s1380
        // Predicated region
        $region45: #{tpu_custom_call.1} parent=31 // pred_check
          %p1382 = pneg %p107
        $region46: #{tpu_custom_call.1} parent=31 // pred_check_branch
          %1384 = sbr.rel (%p1382) target = $region48
        $region47: #{tpu_custom_call.1} parent=31 // pred_region
          %s1386 = ssub.s32 128, 128
          %1387 = vsyncadd %s1378, %s1386
          %s1388 = smul.addr %s21, 128
          %s1389 = scalar_lea.hbm %s3, %s1388
          %s1391 = sshll.u32 %s1381, 4
          %s1392 = int_to_ptr.vmem [resolvable:$true] %s1391
          %1394 = dma.vmem_to_hbm [thread:$0]  %s1392, 128, %s1389, %s1378
        $region48: #{tpu_custom_call.1} parent=31 // pred_fallthru
          _
      $region32: #{tpu_custom_call.1} parent=5 // pred_fallthru
        _
      %p1395 = scmp.le.s32.totalorder 2, %s16
      // Predicated region
      $region49: #{tpu_custom_call.1} parent=5 // pred_check
        %p1396 = pneg %p1395
      $region50: #{tpu_custom_call.1} parent=5 // pred_check_branch
        %1398 = sbr.rel (%p1396) target = $region52
      $region51: #{tpu_custom_call.1} parent=5 // pred_region
        %s1399 = ssub.s32 %s16, 2
        // Predicated region
        $region53: #{tpu_custom_call.1} parent=51 // pred_check
          %p1400 = pneg %p113
        $region54: #{tpu_custom_call.1} parent=51 // pred_check_branch
          %1402 = sbr.rel (%p1400) target = $region56
        $region55: #{tpu_custom_call.1} parent=51 // pred_region
          %s1403 = sand.u32 %s98, 1
          %s1404 = scalar_lea.sflag [#allocation4], %s1403
          %s1405 = sand.u32 %s98, 1
          %s1406 = smul.addr %s1405, 8
          %s1407 = scalar_lea.vmem [#allocation8], %s1406
          %1408 = dma.done %s1404, 128
        $region56: #{tpu_custom_call.1} parent=51 // pred_fallthru
          _
      $region52: #{tpu_custom_call.1} parent=5 // pred_fallthru
        _
    $region6: #{tpu_custom_call.1} parent=1 // loop_footer
      %s20 = sadd.s32 1, %s16
    $region7: #{tpu_custom_call.1} parent=1 // loop_footer_branch
      %15 = sbr.rel target = $region3
    $region8: #{tpu_custom_call.1} parent=1 // loop_exit
      _
    %1409 = vsyncpa [#allocation3], 1
    %s1410 = scalar_lea.sflag [#allocation3], 1
    %1411 = vsyncpa %s1410, 1
    %1412 = vsyncpa [#allocation6], 1
    %1413 = vsyncpa [#allocation4], 1
    %s1414 = scalar_lea.sflag [#allocation4], 1
    %1415 = vsyncpa %s1414, 1

</llo_original>
